<compile_context>
chip_gen: v6e
topology: v6e:2x2x1
jax: 0.10.0
libtpu: 0.0.40
codegen_flags: <defaults>
</compile_context>

<pallas_src>
import functools

import jax
import jax.numpy as jnp
from jax import lax
from jax.experimental import pallas as pl
from jax.experimental.pallas import tpu as pltpu

SEQ = 8
INPUT_SIZE = 4
HIDDEN = 32
OUTPUT_SIZE = 4


def lstm_linear_kernel(x_ref, wih_t_ref, whh_t_ref, b_ref, wlin_ref, blin_ref,
                       pred_ref, *, seq, hidden):
  """Sequential LSTM over time + final Linear, fully resident in VMEM/vregs.

  x_ref:      (seq, input_size)
  wih_t_ref:  (input_size, 4H)  W_ih^T, columns pre-scaled (tanh/2 trick)
  whh_t_ref:  (H, 4H)           W_hh^T, columns pre-scaled likewise
  b_ref:      (1, 4H)           (b_ih + b_hh), pre-scaled likewise
  wlin_ref:   (H, 4H)           W_lin^T zero-padded to 128 output lanes
  blin_ref:   (1, 4H)           b_lin zero-padded to 128 output lanes
  pred_ref:   (seq, 4H)         lane-dense output; real values in [:, :out]
  """
  H = hidden
  G = 4 * H

  # Lane-constant post-activation scale/bias, hoisted out of the time loop.
  # Gate blocks along the 4H lanes are [ i | f | g | o ] (PyTorch order).
  # sigmoid(z) = 0.5*tanh(z/2) + 0.5 and the /2 is already folded into the
  # weights, so a single tanh (ONE EUP push) covers all four gates. (review #1)
  lane = lax.broadcasted_iota(jnp.int32, (1, G), 1)
  is_g_gate = (lane >= 2 * H) & (lane < 3 * H)
  post_scale = jnp.where(is_g_gate, jnp.float32(1.0), jnp.float32(0.5))
  post_bias = jnp.where(is_g_gate, jnp.float32(0.0), jnp.float32(0.5))

  # Hoisted input projection: one (seq, in) @ (in, 4H) MXU matmul + fused
  # (pre-scaled) bias, kept live in vregs (no VMEM scratch).   (review #1, #2)
  xw = jnp.dot(x_ref[...], wih_t_ref[...],
               preferred_element_type=jnp.float32) + b_ref[...]

  whh_t = whh_t_ref[...]                    # (H, 4H), resident across the loop

  h = jnp.zeros((1, H), jnp.float32)
  c = jnp.zeros((1, H), jnp.float32)
  hs = []

  for t in range(seq):                      # static trip count -> unrolled (#9)
    x_proj = xw[t:t + 1, :]                 # (1, 4H) static row slice
    if t == 0:
      gates = x_proj                        # h0 == 0: skip the recurrent matmul
    else:
      gates = x_proj + jnp.dot(h, whh_t, preferred_element_type=jnp.float32)

    # One EUP push + one lane-constant scale/offset for all four gates.
    act = jnp.tanh(gates) * post_scale + post_bias
    i_g = act[:, 0 * H:1 * H]               # sigmoid(i)
    f_g = act[:, 1 * H:2 * H]               # sigmoid(f)
    g_g = act[:, 2 * H:3 * H]               # tanh(g)
    o_g = act[:, 3 * H:4 * H]               # sigmoid(o)
    # All four slices depend only on `act`, so only one slice latency sits on
    # the serial per-step chain; i*g overlaps with f*c.           (review #10)
    c = f_g * c + i_g * g_g
    h = o_g * jnp.tanh(c)
    hs.append(h)                            # stays live in vregs   (review #2)

  # Final Linear over every timestep's hidden state
  # (== linear(lstm_out[-1, :, :]) since batch == 1): one (seq, H) @ (H, 128)
  # matmul into a lane-dense (seq, 128) output slab.          (review #2, #6)
  hs_all = jnp.concatenate(hs, axis=0)      # (seq, H)
  pred_ref[...] = jnp.dot(hs_all, wlin_ref[...],
                          preferred_element_type=jnp.float32) + blin_ref[...]


def prepare_lstm_params(w_ih, w_hh, b_ih, b_hh, w_lin, b_lin):
  """One-time weight prep (review #5): transpose, tanh/2 pre-scale, lane pad.

  Compute once and reuse across forward calls; NOT part of the hot path.
  """
  H = w_hh.shape[1]
  G = 4 * H
  out_size = w_lin.shape[0]

  # Per-lane pre-scale: 1/2 on the sigmoid gates (i, f, o), 1 on the g gate,
  # so that sigmoid(z) == 0.5*tanh(pre*z) + 0.5 with a single in-kernel tanh.
  block = jnp.arange(G, dtype=jnp.int32) // H
  pre = jnp.where(block == 2, 1.0, 0.5).astype(jnp.float32)

  wih_t = (jnp.transpose(w_ih) * pre[None, :]).astype(jnp.float32)   # (in, 4H)
  whh_t = (jnp.transpose(w_hh) * pre[None, :]).astype(jnp.float32)   # (H, 4H)
  b = ((b_ih + b_hh) * pre).reshape(1, G).astype(jnp.float32)        # (1, 4H)

  # Lane-dense Linear: pad the `out_size` output columns up to 128 lanes (#6).
  wlin = jnp.pad(jnp.transpose(w_lin),
                 ((0, 0), (0, G - out_size))).astype(jnp.float32)    # (H, 4H)
  blin = jnp.pad(b_lin.reshape(1, -1),
                 ((0, 0), (0, G - out_size))).astype(jnp.float32)    # (1, 4H)
  return wih_t, whh_t, b, wlin, blin


def lstm_forward(x, params, *, out_size):
  """x: (seq, input_size) float32 -> (seq, out_size), matching LSTM.forward."""
  wih_t, whh_t, b, wlin, blin = params
  seq = x.shape[0]
  hidden = whh_t.shape[0]
  G = 4 * hidden

  kernel = functools.partial(lstm_linear_kernel, seq=seq, hidden=hidden)
  pred_pad = pl.pallas_call(
      kernel,
      out_shape=jax.ShapeDtypeStruct((seq, G), jnp.float32),
      in_specs=[pl.BlockSpec(memory_space=pltpu.MemorySpace.VMEM)] * 6,
      out_specs=pl.BlockSpec(memory_space=pltpu.MemorySpace.VMEM),
  )(x, wih_t, whh_t, b, wlin, blin)
  return pred_pad[:, :out_size]


def lstm_forward_ref(x, w_ih, w_hh, b_ih, b_hh, w_lin, b_lin):
  """Pure-JAX reference (mirrors torch nn.LSTM + nn.Linear)."""
  H = w_hh.shape[1]
  hp = lax.Precision.HIGHEST

  def step(carry, x_t):
    h, c = carry
    gates = (jnp.dot(w_ih, x_t, precision=hp) +
             jnp.dot(w_hh, h, precision=hp) + b_ih + b_hh)
    i_g = jax.nn.sigmoid(gates[0 * H:1 * H])
    f_g = jax.nn.sigmoid(gates[1 * H:2 * H])
    g_g = jnp.tanh(gates[2 * H:3 * H])
    o_g = jax.nn.sigmoid(gates[3 * H:4 * H])
    c_new = f_g * c + i_g * g_g
    h_new = o_g * jnp.tanh(c_new)
    return (h_new, c_new), h_new

  init = (jnp.zeros((H,), jnp.float32), jnp.zeros((H,), jnp.float32))
  _, hs = lax.scan(step, init, x)
  return jnp.dot(hs, w_lin.T, precision=hp) + b_lin


if __name__ == "__main__":
  key = jax.random.PRNGKey(0)
  ks = jax.random.split(key, 8)
  k_hid = 1.0 / (HIDDEN ** 0.5)

  # PyTorch-style uniform(-1/sqrt(H), 1/sqrt(H)) init for LSTM and Linear.
  w_ih = jax.random.uniform(ks[0], (4 * HIDDEN, INPUT_SIZE), jnp.float32,
                            -k_hid, k_hid)
  w_hh = jax.random.uniform(ks[1], (4 * HIDDEN, HIDDEN), jnp.float32,
                            -k_hid, k_hid)
  b_ih = jax.random.uniform(ks[2], (4 * HIDDEN,), jnp.float32, -k_hid, k_hid)
  b_hh = jax.random.uniform(ks[3], (4 * HIDDEN,), jnp.float32, -k_hid, k_hid)
  w_lin = jax.random.uniform(ks[4], (OUTPUT_SIZE, HIDDEN), jnp.float32,
                             -k_hid, k_hid)
  b_lin = jax.random.uniform(ks[5], (OUTPUT_SIZE,), jnp.float32, -k_hid, k_hid)

  x = jax.random.normal(ks[6], (SEQ, INPUT_SIZE), jnp.float32)

  # One-time weight prep, hoisted off the per-call hot path (review #5).
  params = prepare_lstm_params(w_ih, w_hh, b_ih, b_hh, w_lin, b_lin)
  params = jax.block_until_ready(params)

  fwd = jax.jit(functools.partial(lstm_forward, out_size=OUTPUT_SIZE))
  pred = jax.block_until_ready(fwd(x, params))

  ref = jax.block_until_ready(
      lstm_forward_ref(x, w_ih, w_hh, b_ih, b_hh, w_lin, b_lin))

  assert pred.shape == (SEQ, OUTPUT_SIZE), pred.shape
  max_err = float(jnp.max(jnp.abs(pred - ref)))
  # 2e-4 absorbs MXU multi-pass f32 / EUP-approx differences vs the XLA ref.
  assert jnp.allclose(pred, ref, atol=2e-4, rtol=2e-4), f"max abs err {max_err}"
  print("KERNEL_OK")
</pallas_src>

<mosaic_0001>
module attributes {stable_mosaic.version = 11 : i64} {
  func.func @lstm_linear_kernel(%arg0: memref<8x4xf32, #tpu.memory_space<vmem>>, %arg1: memref<4x128xf32, #tpu.memory_space<vmem>>, %arg2: memref<32x128xf32, #tpu.memory_space<vmem>>, %arg3: memref<1x128xf32, #tpu.memory_space<vmem>>, %arg4: memref<32x128xf32, #tpu.memory_space<vmem>>, %arg5: memref<1x128xf32, #tpu.memory_space<vmem>>, %arg6: memref<8x128xf32, #tpu.memory_space<vmem>>) attributes {dimension_semantics = [], scalar_prefetch = 0 : i64, scratch_operands = 0 : i64, tpu.core_type = #tpu.core_type<tc>} {
    %0 = tpu.iota {dimensions = array<i32: 1>} : vector<1x128xi32>
    %c64_i32 = arith.constant 64 : i32
    %1 = vector.broadcast %c64_i32 : i32 to vector<1x128xi32>
    %2 = arith.cmpi sge, %0, %1 : vector<1x128xi32>
    %c96_i32 = arith.constant 96 : i32
    %3 = vector.broadcast %c96_i32 : i32 to vector<1x128xi32>
    %4 = arith.cmpi slt, %0, %3 : vector<1x128xi32>
    %5 = arith.andi %2, %4 : vector<1x128xi1>
    %cst = arith.constant 1.000000e+00 : f32
    %cst_0 = arith.constant 5.000000e-01 : f32
    %6 = vector.broadcast %cst : f32 to vector<1x128xf32>
    %7 = vector.broadcast %cst_0 : f32 to vector<1x128xf32>
    %8 = arith.select %5, %6, %7 : vector<1x128xi1>, vector<1x128xf32>
    %cst_1 = arith.constant 0.000000e+00 : f32
    %cst_2 = arith.constant 5.000000e-01 : f32
    %9 = vector.broadcast %cst_1 : f32 to vector<1x128xf32>
    %10 = vector.broadcast %cst_2 : f32 to vector<1x128xf32>
    %11 = arith.select %5, %9, %10 : vector<1x128xi1>, vector<1x128xf32>
    %c0 = arith.constant 0 : index
    %c0_3 = arith.constant 0 : index
    %12 = vector.load %arg0[%c0, %c0_3] : memref<8x4xf32, #tpu.memory_space<vmem>>, vector<8x4xf32>
    %c0_4 = arith.constant 0 : index
    %c0_5 = arith.constant 0 : index
    %13 = vector.load %arg1[%c0_4, %c0_5] : memref<4x128xf32, #tpu.memory_space<vmem>>, vector<4x128xf32>
    %cst_6 = arith.constant dense<0.000000e+00> : vector<8x128xf32>
    %14 = tpu.matmul %12, %13, %cst_6 {dimension_numbers = #tpu.dot_dimension_numbers<[1], [0], [0], [1], [0, 0, 1, 1], [], []>} : vector<8x4xf32>, vector<4x128xf32>, vector<8x128xf32> -> vector<8x128xf32>
    %c0_7 = arith.constant 0 : index
    %c0_8 = arith.constant 0 : index
    %15 = vector.load %arg3[%c0_7, %c0_8] : memref<1x128xf32, #tpu.memory_space<vmem>>, vector<1x128xf32>
    %16 = vector.broadcast %15 : vector<1x128xf32> to vector<8x128xf32>
    %17 = arith.addf %14, %16 : vector<8x128xf32>
    %c0_9 = arith.constant 0 : index
    %c0_10 = arith.constant 0 : index
    %18 = vector.load %arg2[%c0_9, %c0_10] : memref<32x128xf32, #tpu.memory_space<vmem>>, vector<32x128xf32>
    %cst_11 = arith.constant 0.000000e+00 : f32
    %19 = vector.broadcast %cst_11 : f32 to vector<1x32xf32>
    %20 = vector.extract_strided_slice %17 {offsets = [0, 0], sizes = [1, 128], strides = [1, 1]} : vector<8x128xf32> to vector<1x128xf32>
    %21 = math.tanh %20 : vector<1x128xf32>
    %22 = arith.mulf %21, %8 : vector<1x128xf32>
    %23 = arith.addf %22, %11 : vector<1x128xf32>
    %24 = vector.extract_strided_slice %23 {offsets = [0, 0], sizes = [1, 32], strides = [1, 1]} : vector<1x128xf32> to vector<1x32xf32>
    %25 = vector.extract_strided_slice %23 {offsets = [0, 32], sizes = [1, 32], strides = [1, 1]} : vector<1x128xf32> to vector<1x32xf32>
    %26 = vector.extract_strided_slice %23 {offsets = [0, 64], sizes = [1, 32], strides = [1, 1]} : vector<1x128xf32> to vector<1x32xf32>
    %27 = vector.extract_strided_slice %23 {offsets = [0, 96], sizes = [1, 32], strides = [1, 1]} : vector<1x128xf32> to vector<1x32xf32>
    %28 = arith.mulf %25, %19 : vector<1x32xf32>
    %29 = arith.mulf %24, %26 : vector<1x32xf32>
    %30 = arith.addf %28, %29 : vector<1x32xf32>
    %31 = math.tanh %30 : vector<1x32xf32>
    %32 = arith.mulf %27, %31 : vector<1x32xf32>
    %33 = vector.extract_strided_slice %17 {offsets = [1, 0], sizes = [1, 128], strides = [1, 1]} : vector<8x128xf32> to vector<1x128xf32>
    %cst_12 = arith.constant dense<0.000000e+00> : vector<1x128xf32>
    %34 = tpu.matmul %32, %18, %cst_12 {dimension_numbers = #tpu.dot_dimension_numbers<[1], [0], [0], [1], [0, 0, 1, 1], [], []>} : vector<1x32xf32>, vector<32x128xf32>, vector<1x128xf32> -> vector<1x128xf32>
    %35 = arith.addf %33, %34 : vector<1x128xf32>
    %36 = math.tanh %35 : vector<1x128xf32>
    %37 = arith.mulf %36, %8 : vector<1x128xf32>
    %38 = arith.addf %37, %11 : vector<1x128xf32>
    %39 = vector.extract_strided_slice %38 {offsets = [0, 0], sizes = [1, 32], strides = [1, 1]} : vector<1x128xf32> to vector<1x32xf32>
    %40 = vector.extract_strided_slice %38 {offsets = [0, 32], sizes = [1, 32], strides = [1, 1]} : vector<1x128xf32> to vector<1x32xf32>
    %41 = vector.extract_strided_slice %38 {offsets = [0, 64], sizes = [1, 32], strides = [1, 1]} : vector<1x128xf32> to vector<1x32xf32>
    %42 = vector.extract_strided_slice %38 {offsets = [0, 96], sizes = [1, 32], strides = [1, 1]} : vector<1x128xf32> to vector<1x32xf32>
    %43 = arith.mulf %40, %30 : vector<1x32xf32>
    %44 = arith.mulf %39, %41 : vector<1x32xf32>
    %45 = arith.addf %43, %44 : vector<1x32xf32>
    %46 = math.tanh %45 : vector<1x32xf32>
    %47 = arith.mulf %42, %46 : vector<1x32xf32>
    %48 = vector.extract_strided_slice %17 {offsets = [2, 0], sizes = [1, 128], strides = [1, 1]} : vector<8x128xf32> to vector<1x128xf32>
    %cst_13 = arith.constant dense<0.000000e+00> : vector<1x128xf32>
    %49 = tpu.matmul %47, %18, %cst_13 {dimension_numbers = #tpu.dot_dimension_numbers<[1], [0], [0], [1], [0, 0, 1, 1], [], []>} : vector<1x32xf32>, vector<32x128xf32>, vector<1x128xf32> -> vector<1x128xf32>
    %50 = arith.addf %48, %49 : vector<1x128xf32>
    %51 = math.tanh %50 : vector<1x128xf32>
    %52 = arith.mulf %51, %8 : vector<1x128xf32>
    %53 = arith.addf %52, %11 : vector<1x128xf32>
    %54 = vector.extract_strided_slice %53 {offsets = [0, 0], sizes = [1, 32], strides = [1, 1]} : vector<1x128xf32> to vector<1x32xf32>
    %55 = vector.extract_strided_slice %53 {offsets = [0, 32], sizes = [1, 32], strides = [1, 1]} : vector<1x128xf32> to vector<1x32xf32>
    %56 = vector.extract_strided_slice %53 {offsets = [0, 64], sizes = [1, 32], strides = [1, 1]} : vector<1x128xf32> to vector<1x32xf32>
    %57 = vector.extract_strided_slice %53 {offsets = [0, 96], sizes = [1, 32], strides = [1, 1]} : vector<1x128xf32> to vector<1x32xf32>
    %58 = arith.mulf %55, %45 : vector<1x32xf32>
    %59 = arith.mulf %54, %56 : vector<1x32xf32>
    %60 = arith.addf %58, %59 : vector<1x32xf32>
    %61 = math.tanh %60 : vector<1x32xf32>
    %62 = arith.mulf %57, %61 : vector<1x32xf32>
    %63 = vector.extract_strided_slice %17 {offsets = [3, 0], sizes = [1, 128], strides = [1, 1]} : vector<8x128xf32> to vector<1x128xf32>
    %cst_14 = arith.constant dense<0.000000e+00> : vector<1x128xf32>
    %64 = tpu.matmul %62, %18, %cst_14 {dimension_numbers = #tpu.dot_dimension_numbers<[1], [0], [0], [1], [0, 0, 1, 1], [], []>} : vector<1x32xf32>, vector<32x128xf32>, vector<1x128xf32> -> vector<1x128xf32>
    %65 = arith.addf %63, %64 : vector<1x128xf32>
    %66 = math.tanh %65 : vector<1x128xf32>
    %67 = arith.mulf %66, %8 : vector<1x128xf32>
    %68 = arith.addf %67, %11 : vector<1x128xf32>
    %69 = vector.extract_strided_slice %68 {offsets = [0, 0], sizes = [1, 32], strides = [1, 1]} : vector<1x128xf32> to vector<1x32xf32>
    %70 = vector.extract_strided_slice %68 {offsets = [0, 32], sizes = [1, 32], strides = [1, 1]} : vector<1x128xf32> to vector<1x32xf32>
    %71 = vector.extract_strided_slice %68 {offsets = [0, 64], sizes = [1, 32], strides = [1, 1]} : vector<1x128xf32> to vector<1x32xf32>
    %72 = vector.extract_strided_slice %68 {offsets = [0, 96], sizes = [1, 32], strides = [1, 1]} : vector<1x128xf32> to vector<1x32xf32>
    %73 = arith.mulf %70, %60 : vector<1x32xf32>
    %74 = arith.mulf %69, %71 : vector<1x32xf32>
    %75 = arith.addf %73, %74 : vector<1x32xf32>
    %76 = math.tanh %75 : vector<1x32xf32>
    %77 = arith.mulf %72, %76 : vector<1x32xf32>
    %78 = vector.extract_strided_slice %17 {offsets = [4, 0], sizes = [1, 128], strides = [1, 1]} : vector<8x128xf32> to vector<1x128xf32>
    %cst_15 = arith.constant dense<0.000000e+00> : vector<1x128xf32>
    %79 = tpu.matmul %77, %18, %cst_15 {dimension_numbers = #tpu.dot_dimension_numbers<[1], [0], [0], [1], [0, 0, 1, 1], [], []>} : vector<1x32xf32>, vector<32x128xf32>, vector<1x128xf32> -> vector<1x128xf32>
    %80 = arith.addf %78, %79 : vector<1x128xf32>
    %81 = math.tanh %80 : vector<1x128xf32>
    %82 = arith.mulf %81, %8 : vector<1x128xf32>
    %83 = arith.addf %82, %11 : vector<1x128xf32>
    %84 = vector.extract_strided_slice %83 {offsets = [0, 0], sizes = [1, 32], strides = [1, 1]} : vector<1x128xf32> to vector<1x32xf32>
    %85 = vector.extract_strided_slice %83 {offsets = [0, 32], sizes = [1, 32], strides = [1, 1]} : vector<1x128xf32> to vector<1x32xf32>
    %86 = vector.extract_strided_slice %83 {offsets = [0, 64], sizes = [1, 32], strides = [1, 1]} : vector<1x128xf32> to vector<1x32xf32>
    %87 = vector.extract_strided_slice %83 {offsets = [0, 96], sizes = [1, 32], strides = [1, 1]} : vector<1x128xf32> to vector<1x32xf32>
    %88 = arith.mulf %85, %75 : vector<1x32xf32>
    %89 = arith.mulf %84, %86 : vector<1x32xf32>
    %90 = arith.addf %88, %89 : vector<1x32xf32>
    %91 = math.tanh %90 : vector<1x32xf32>
    %92 = arith.mulf %87, %91 : vector<1x32xf32>
    %93 = vector.extract_strided_slice %17 {offsets = [5, 0], sizes = [1, 128], strides = [1, 1]} : vector<8x128xf32> to vector<1x128xf32>
    %cst_16 = arith.constant dense<0.000000e+00> : vector<1x128xf32>
    %94 = tpu.matmul %92, %18, %cst_16 {dimension_numbers = #tpu.dot_dimension_numbers<[1], [0], [0], [1], [0, 0, 1, 1], [], []>} : vector<1x32xf32>, vector<32x128xf32>, vector<1x128xf32> -> vector<1x128xf32>
    %95 = arith.addf %93, %94 : vector<1x128xf32>
    %96 = math.tanh %95 : vector<1x128xf32>
    %97 = arith.mulf %96, %8 : vector<1x128xf32>
    %98 = arith.addf %97, %11 : vector<1x128xf32>
    %99 = vector.extract_strided_slice %98 {offsets = [0, 0], sizes = [1, 32], strides = [1, 1]} : vector<1x128xf32> to vector<1x32xf32>
    %100 = vector.extract_strided_slice %98 {offsets = [0, 32], sizes = [1, 32], strides = [1, 1]} : vector<1x128xf32> to vector<1x32xf32>
    %101 = vector.extract_strided_slice %98 {offsets = [0, 64], sizes = [1, 32], strides = [1, 1]} : vector<1x128xf32> to vector<1x32xf32>
    %102 = vector.extract_strided_slice %98 {offsets = [0, 96], sizes = [1, 32], strides = [1, 1]} : vector<1x128xf32> to vector<1x32xf32>
    %103 = arith.mulf %100, %90 : vector<1x32xf32>
    %104 = arith.mulf %99, %101 : vector<1x32xf32>
    %105 = arith.addf %103, %104 : vector<1x32xf32>
    %106 = math.tanh %105 : vector<1x32xf32>
    %107 = arith.mulf %102, %106 : vector<1x32xf32>
    %108 = vector.extract_strided_slice %17 {offsets = [6, 0], sizes = [1, 128], strides = [1, 1]} : vector<8x128xf32> to vector<1x128xf32>
    %cst_17 = arith.constant dense<0.000000e+00> : vector<1x128xf32>
    %109 = tpu.matmul %107, %18, %cst_17 {dimension_numbers = #tpu.dot_dimension_numbers<[1], [0], [0], [1], [0, 0, 1, 1], [], []>} : vector<1x32xf32>, vector<32x128xf32>, vector<1x128xf32> -> vector<1x128xf32>
    %110 = arith.addf %108, %109 : vector<1x128xf32>
    %111 = math.tanh %110 : vector<1x128xf32>
    %112 = arith.mulf %111, %8 : vector<1x128xf32>
    %113 = arith.addf %112, %11 : vector<1x128xf32>
    %114 = vector.extract_strided_slice %113 {offsets = [0, 0], sizes = [1, 32], strides = [1, 1]} : vector<1x128xf32> to vector<1x32xf32>
    %115 = vector.extract_strided_slice %113 {offsets = [0, 32], sizes = [1, 32], strides = [1, 1]} : vector<1x128xf32> to vector<1x32xf32>
    %116 = vector.extract_strided_slice %113 {offsets = [0, 64], sizes = [1, 32], strides = [1, 1]} : vector<1x128xf32> to vector<1x32xf32>
    %117 = vector.extract_strided_slice %113 {offsets = [0, 96], sizes = [1, 32], strides = [1, 1]} : vector<1x128xf32> to vector<1x32xf32>
    %118 = arith.mulf %115, %105 : vector<1x32xf32>
    %119 = arith.mulf %114, %116 : vector<1x32xf32>
    %120 = arith.addf %118, %119 : vector<1x32xf32>
    %121 = math.tanh %120 : vector<1x32xf32>
    %122 = arith.mulf %117, %121 : vector<1x32xf32>
    %123 = vector.extract_strided_slice %17 {offsets = [7, 0], sizes = [1, 128], strides = [1, 1]} : vector<8x128xf32> to vector<1x128xf32>
    %cst_18 = arith.constant dense<0.000000e+00> : vector<1x128xf32>
    %124 = tpu.matmul %122, %18, %cst_18 {dimension_numbers = #tpu.dot_dimension_numbers<[1], [0], [0], [1], [0, 0, 1, 1], [], []>} : vector<1x32xf32>, vector<32x128xf32>, vector<1x128xf32> -> vector<1x128xf32>
    %125 = arith.addf %123, %124 : vector<1x128xf32>
    %126 = math.tanh %125 : vector<1x128xf32>
    %127 = arith.mulf %126, %8 : vector<1x128xf32>
    %128 = arith.addf %127, %11 : vector<1x128xf32>
    %129 = vector.extract_strided_slice %128 {offsets = [0, 0], sizes = [1, 32], strides = [1, 1]} : vector<1x128xf32> to vector<1x32xf32>
    %130 = vector.extract_strided_slice %128 {offsets = [0, 32], sizes = [1, 32], strides = [1, 1]} : vector<1x128xf32> to vector<1x32xf32>
    %131 = vector.extract_strided_slice %128 {offsets = [0, 64], sizes = [1, 32], strides = [1, 1]} : vector<1x128xf32> to vector<1x32xf32>
    %132 = vector.extract_strided_slice %128 {offsets = [0, 96], sizes = [1, 32], strides = [1, 1]} : vector<1x128xf32> to vector<1x32xf32>
    %133 = arith.mulf %130, %120 : vector<1x32xf32>
    %134 = arith.mulf %129, %131 : vector<1x32xf32>
    %135 = arith.addf %133, %134 : vector<1x32xf32>
    %136 = math.tanh %135 : vector<1x32xf32>
    %137 = arith.mulf %132, %136 : vector<1x32xf32>
    %138 = tpu.concatenate %32, %47, %62, %77, %92, %107, %122, %137 in 0 : vector<1x32xf32>, vector<1x32xf32>, vector<1x32xf32>, vector<1x32xf32>, vector<1x32xf32>, vector<1x32xf32>, vector<1x32xf32>, vector<1x32xf32> -> vector<8x32xf32>
    %c0_19 = arith.constant 0 : index
    %c0_20 = arith.constant 0 : index
    %139 = vector.load %arg4[%c0_19, %c0_20] : memref<32x128xf32, #tpu.memory_space<vmem>>, vector<32x128xf32>
    %cst_21 = arith.constant dense<0.000000e+00> : vector<8x128xf32>
    %140 = tpu.matmul %138, %139, %cst_21 {dimension_numbers = #tpu.dot_dimension_numbers<[1], [0], [0], [1], [0, 0, 1, 1], [], []>} : vector<8x32xf32>, vector<32x128xf32>, vector<8x128xf32> -> vector<8x128xf32>
    %c0_22 = arith.constant 0 : index
    %c0_23 = arith.constant 0 : index
    %141 = vector.load %arg5[%c0_22, %c0_23] : memref<1x128xf32, #tpu.memory_space<vmem>>, vector<1x128xf32>
    %142 = vector.broadcast %141 : vector<1x128xf32> to vector<8x128xf32>
    %143 = arith.addf %140, %142 : vector<8x128xf32>
    %c0_24 = arith.constant 0 : index
    %c0_25 = arith.constant 0 : index
    %144 = vector.load %arg6[%c0_24, %c0_25] : memref<8x128xf32, #tpu.memory_space<vmem>>, vector<8x128xf32>
    tpu.vector_store %arg6[%c0_24, %c0_25], %143 {strides = array<i32>} : memref<8x128xf32, #tpu.memory_space<vmem>>, vector<8x128xf32>,
    return
  }
}

</mosaic_0001>

<llo_original>
// kernel: lstm_forward.1
$region0: #{lstm_forward.1}
  #allocation0 [shape = 'u32[]', space=smem, size = 0x4, offset = 0x4, fixed_abs, tag = 'smem constant byte address 0x4 - core index']
  #allocation1 [shape = 'u32[144,128]{1,0:T(1,128)}', space=vmem, size = 0x12000, scoped, tag = 'internal scratch']
  %s0 = inlined_call_operand.vmem [shape: f32[8,4], index: 0, kind: input, shape index: {}]
  %s1 = inlined_call_operand.vmem [shape: f32[4,128], index: 1, kind: input, shape index: {}]
  %s2 = inlined_call_operand.hbm [shape: f32[32,128], index: 2, kind: input, shape index: {}]
  %s3 = inlined_call_operand.vmem [shape: f32[1,128], index: 3, kind: input, shape index: {}]
  %s4 = inlined_call_operand.hbm [shape: f32[32,128], index: 4, kind: input, shape index: {}]
  %s5 = inlined_call_operand.vmem [shape: f32[1,128], index: 5, kind: input, shape index: {}]
  %s6 = inlined_call_operand.vmem [shape: f32[8,128], index: 6, kind: output, shape index: {}]
  %s7 = sld [smem:[#allocation0]]
  $region42: #{lstm_forward.1} parent=0
    _
  %s9 = ssub.s32 1, %s7
  %s10 = scalar_select 0, %s9, %s7
  $region1: #{lstm_forward.1} parent=0
    #allocation2 [shape = 'u8[16384]{0}', space=vmem, size = 0x4000, scoped, tag = 'input window, operand 2, single buffered']
    #allocation3 [shape = 's32[1]{0}', space=sflag, size = 0x4, scoped, tag = 'scoped memory for lstm_forward.1']
    #allocation4 [shape = 'u8[16384]{0}', space=vmem, size = 0x4000, scoped, tag = 'input window, operand 4, single buffered']
    #allocation5 [shape = 's32[1]{0}', space=sflag, size = 0x4, scoped, tag = 'scoped memory for lstm_forward.1']
    %11 = vsyncpa [#allocation3], 0
    %12 = vsyncpa [#allocation5], 0
    // Predicated region
    $region2: #{lstm_forward.1} parent=1 // pred_check
      _
    $region3: #{lstm_forward.1} parent=1 // pred_check_branch
      %14 = sbr.rel (0) target = $region5
    $region4: #{lstm_forward.1} parent=1 // pred_region
      _
    $region5: #{lstm_forward.1} parent=1 // pred_fallthru
      _
    // Predicated region
    $region6: #{lstm_forward.1} parent=1 // pred_check
      _
    $region7: #{lstm_forward.1} parent=1 // pred_check_branch
      %16 = sbr.rel (0) target = $region9
    $region8: #{lstm_forward.1} parent=1 // pred_region
      _
    $region9: #{lstm_forward.1} parent=1 // pred_fallthru
      _
    // Predicated region
    $region10: #{lstm_forward.1} parent=1 // pred_check
      _
    $region11: #{lstm_forward.1} parent=1 // pred_check_branch
      %18 = sbr.rel (0) target = $region13
    $region12: #{lstm_forward.1} parent=1 // pred_region
      %s20 = ssub.s32 512, 512
      %21 = vsyncadd [#allocation3], %s20
      %s22 = sshll.u32 [#allocation2], 4
      %s23 = int_to_ptr.vmem [resolvable:$true] %s22
      %28 = dma.hbm_to_vmem [thread:$0]  %s2, 512, %s23, [#allocation3], 128, 128, 8
    $region13: #{lstm_forward.1} parent=1 // pred_fallthru
      _
    // Predicated region
    $region14: #{lstm_forward.1} parent=1 // pred_check
      _
    $region15: #{lstm_forward.1} parent=1 // pred_check_branch
      %30 = sbr.rel (0) target = $region17
    $region16: #{lstm_forward.1} parent=1 // pred_region
      _
    $region17: #{lstm_forward.1} parent=1 // pred_fallthru
      _
    // Predicated region
    $region18: #{lstm_forward.1} parent=1 // pred_check
      _
    $region19: #{lstm_forward.1} parent=1 // pred_check_branch
      %32 = sbr.rel (0) target = $region21
    $region20: #{lstm_forward.1} parent=1 // pred_region
      %s34 = ssub.s32 512, 512
      %35 = vsyncadd [#allocation5], %s34
      %s36 = sshll.u32 [#allocation4], 4
      %s37 = int_to_ptr.vmem [resolvable:$true] %s36
      %42 = dma.hbm_to_vmem [thread:$0]  %s4, 512, %s37, [#allocation5], 128, 128, 8
    $region21: #{lstm_forward.1} parent=1 // pred_fallthru
      _
    // Predicated region
    $region22: #{lstm_forward.1} parent=1 // pred_check
      _
    $region23: #{lstm_forward.1} parent=1 // pred_check_branch
      %44 = sbr.rel (0) target = $region25
    $region24: #{lstm_forward.1} parent=1 // pred_region
      _
    $region25: #{lstm_forward.1} parent=1 // pred_fallthru
      _
    // Predicated region
    $region26: #{lstm_forward.1} parent=1 // pred_check
      _
    $region27: #{lstm_forward.1} parent=1 // pred_check_branch
      %46 = sbr.rel (0) target = $region29
    $region28: #{lstm_forward.1} parent=1 // pred_region
      %47 = dma.done [#allocation3], 512
    $region29: #{lstm_forward.1} parent=1 // pred_fallthru
      _
    // Predicated region
    $region30: #{lstm_forward.1} parent=1 // pred_check
      _
    $region31: #{lstm_forward.1} parent=1 // pred_check_branch
      %49 = sbr.rel (0) target = $region33
    $region32: #{lstm_forward.1} parent=1 // pred_region
      %50 = dma.done [#allocation5], 512
    $region33: #{lstm_forward.1} parent=1 // pred_fallthru
      _
    %v51 = vlaneseq
    %v52 = vand.u32 %v51, 127
    %vm53 = vcmp.ge.s32.totalorder %v52, 64
    %vm54 = vcmp.lt.s32.totalorder %v52, 96
    %vm55 = vmand %vm53, %vm54
    %v56 = vsel %vm55, 1.0, 0.5
    %v57 = vsel %vm55, 0.0, 0.5
    %v58 = vld [vmem:[%s0] sm:$0xff]
    %v59 = vld [vmem:[%s1] sm:$0xf]
    %v60 = vld [vmem:[%s3] sm:$0x1]
    %v62 = vlaneseq
    %v63 = vshrl.u32 %v62, 7
    %v64 = vsub.s32 0, %v63
    %v65 = vrot.slane %v60, %v64
    %vm67 = vcmask 31744
    %v69 = vsel %vm67, %v58, 0
    %vm71 = vcmask 1043456
    %v73 = vsel %vm71, %v59, 0
    %75 = vmatprep.subr.mxu0 0.0
    %76 = vmatpush1.msra.mxu0 0.0
    %77 = vmatprep.subr.mxu0 0.0
    %78 = vmatpush1.msra.mxu0 0.0
    %79 = vmatprep.subr.mxu0 0.0
    %80 = vmatpush1.msra.mxu0 0.0
    %81 = vmatprep.subr.mxu0 0.0
    %82 = vmatpush1.msra.mxu0 0.0
    %83 = vmatprep.subr.mxu0 0.0
    %84 = vmatpush1.msra.mxu0 0.0
    %85 = vmatprep.subr.mxu0 0.0
    %86 = vmatpush1.msra.mxu0 0.0
    %87 = vmatprep.subr.mxu0 0.0
    %88 = vmatpush1.msra.mxu0 0.0
    %89 = vmatprep.subr.mxu0 0.0
    %90 = vmatpush1.msra.mxu0 0.0
    %91 = vmatprep.subr.mxu0 0.0
    %92 = vmatpush1.msra.mxu0 0.0
    %93 = vmatprep.subr.mxu0 0.0
    %94 = vmatpush1.msra.mxu0 0.0
    %95 = vmatprep.subr.mxu0 0.0
    %96 = vmatpush1.msra.mxu0 0.0
    %97 = vmatprep.subr.mxu0 0.0
    %98 = vmatpush1.msra.mxu0 0.0
    %99 = vmatprep.subr.mxu0 0.0
    %100 = vmatpush1.msra.mxu0 0.0
    %101 = vmatprep.subr.mxu0 0.0
    %102 = vmatpush1.msra.mxu0 0.0
    %103 = vmatprep.subr.mxu0 0.0
    %104 = vmatpush1.msra.mxu0 0.0
    %105 = vmatprep.subr.mxu0 0.0
    %106 = vmatpush1.msra.mxu0 %v73
    %107 = vmatprep.subr.mxu0 0.0
    %108 = vmatpush2.msra.mxu0 0.0
    %109 = vmatprep.subr.mxu0 0.0
    %110 = vmatpush2.msra.mxu0 0.0
    %111 = vmatprep.subr.mxu0 0.0
    %112 = vmatpush2.msra.mxu0 0.0
    %113 = vmatprep.subr.mxu0 0.0
    %114 = vmatpush2.msra.mxu0 0.0
    %115 = vmatprep.subr.mxu0 0.0
    %116 = vmatpush2.msra.mxu0 0.0
    %117 = vmatprep.subr.mxu0 0.0
    %118 = vmatpush2.msra.mxu0 0.0
    %119 = vmatprep.subr.mxu0 0.0
    %120 = vmatpush2.msra.mxu0 0.0
    %121 = vmatprep.subr.mxu0 0.0
    %122 = vmatpush2.msra.mxu0 0.0
    %123 = vmatprep.subr.mxu0 0.0
    %124 = vmatpush2.msra.mxu0 0.0
    %125 = vmatprep.subr.mxu0 0.0
    %126 = vmatpush2.msra.mxu0 0.0
    %127 = vmatprep.subr.mxu0 0.0
    %128 = vmatpush2.msra.mxu0 0.0
    %129 = vmatprep.subr.mxu0 0.0
    %130 = vmatpush2.msra.mxu0 0.0
    %131 = vmatprep.subr.mxu0 0.0
    %132 = vmatpush2.msra.mxu0 0.0
    %133 = vmatprep.subr.mxu0 0.0
    %134 = vmatpush2.msra.mxu0 0.0
    %135 = vmatprep.subr.mxu0 0.0
    %136 = vmatpush2.msra.mxu0 0.0
    %137 = vmatprep.subr.mxu0 0.0
    %138 = vmatpush2.msra.mxu0 0.0
    %139 = vmatprep.mubr.f32.mxu0 0.0
    %140 = vmatmul.mubr.f32.gmra.mxu0 %v69
    %v141 = vpop.f32.mrf.mxu0
    %v142 = vadd.f32 %v65, %v141
    %v143 = vpop.f32.mrf.mxu0
    %144 = vdwg.mxu0
    %v145 = vld [vmem:[#allocation2] sm:$0xff]
    %v146 = vld [vmem:[#allocation2 + $0x8] sm:$0xff]
    %v147 = vld [vmem:[#allocation2 + $0x10] sm:$0xff]
    %v148 = vld [vmem:[#allocation2 + $0x18] sm:$0xff]
    %v149 = vtanh.pop %v142
    %v150 = vmul.f32 %v149, %v56
    %v151 = vadd.f32 %v150, %v57
    %v152 = vmul.f32 %v151, 0.0
    %154 = vrot.lane.b32.xlu0 %v151, 64
    %v155 = vpop.permute.xlu0 %154
    %v157 = vmul.f32 %v151, %v155
    %159 = vrot.lane.b32.xlu0 %v157, 32
    %v160 = vpop.permute.xlu0 %159
    %v162 = vadd.f32 %v152, %v160
    %v163 = vtanh.pop %v162
    %165 = vrot.lane.b32.xlu0 %v163, 64
    %v166 = vpop.permute.xlu0 %165
    %v168 = vmul.f32 %v151, %v166
    %170 = vrot.lane.b32.xlu0 %v168, 32
    %v171 = vpop.permute.xlu0 %170
    %vm172 = vcmask 261120
    %v173 = vsel %vm172, %v171, 0
    %175 = vmatprep.subr.mxu0 0.0
    %176 = vmatpush1.msra.mxu0 0.0
    %177 = vmatprep.subr.mxu0 0.0
    %178 = vmatpush1.msra.mxu0 0.0
    %179 = vmatprep.subr.mxu0 0.0
    %180 = vmatpush1.msra.mxu0 0.0
    %181 = vmatprep.subr.mxu0 0.0
    %182 = vmatpush1.msra.mxu0 0.0
    %183 = vmatprep.subr.mxu0 0.0
    %184 = vmatpush1.msra.mxu0 0.0
    %185 = vmatprep.subr.mxu0 0.0
    %186 = vmatpush1.msra.mxu0 0.0
    %187 = vmatprep.subr.mxu0 0.0
    %188 = vmatpush1.msra.mxu0 0.0
    %189 = vmatprep.subr.mxu0 0.0
    %190 = vmatpush1.msra.mxu0 0.0
    %191 = vmatprep.subr.mxu0 0.0
    %192 = vmatpush1.msra.mxu0 0.0
    %193 = vmatprep.subr.mxu0 0.0
    %194 = vmatpush1.msra.mxu0 0.0
    %195 = vmatprep.subr.mxu0 0.0
    %196 = vmatpush1.msra.mxu0 0.0
    %197 = vmatprep.subr.mxu0 0.0
    %198 = vmatpush1.msra.mxu0 0.0
    %199 = vmatprep.subr.mxu0 0.0
    %200 = vmatpush1.msra.mxu0 %v148
    %201 = vmatprep.subr.mxu0 0.0
    %202 = vmatpush1.msra.mxu0 %v147
    %203 = vmatprep.subr.mxu0 0.0
    %204 = vmatpush1.msra.mxu0 %v146
    %205 = vmatprep.subr.mxu0 0.0
    %206 = vmatpush1.msra.mxu0 %v145
    %207 = vmatprep.subr.mxu0 0.0
    %208 = vmatpush2.msra.mxu0 0.0
    %209 = vmatprep.subr.mxu0 0.0
    %210 = vmatpush2.msra.mxu0 0.0
    %211 = vmatprep.subr.mxu0 0.0
    %212 = vmatpush2.msra.mxu0 0.0
    %213 = vmatprep.subr.mxu0 0.0
    %214 = vmatpush2.msra.mxu0 0.0
    %215 = vmatprep.subr.mxu0 0.0
    %216 = vmatpush2.msra.mxu0 0.0
    %217 = vmatprep.subr.mxu0 0.0
    %218 = vmatpush2.msra.mxu0 0.0
    %219 = vmatprep.subr.mxu0 0.0
    %220 = vmatpush2.msra.mxu0 0.0
    %221 = vmatprep.subr.mxu0 0.0
    %222 = vmatpush2.msra.mxu0 0.0
    %223 = vmatprep.subr.mxu0 0.0
    %224 = vmatpush2.msra.mxu0 0.0
    %225 = vmatprep.subr.mxu0 0.0
    %226 = vmatpush2.msra.mxu0 0.0
    %227 = vmatprep.subr.mxu0 0.0
    %228 = vmatpush2.msra.mxu0 0.0
    %229 = vmatprep.subr.mxu0 0.0
    %230 = vmatpush2.msra.mxu0 0.0
    %231 = vmatprep.subr.mxu0 0.0
    %232 = vmatpush2.msra.mxu0 0.0
    %233 = vmatprep.subr.mxu0 0.0
    %234 = vmatpush2.msra.mxu0 0.0
    %235 = vmatprep.subr.mxu0 0.0
    %236 = vmatpush2.msra.mxu0 0.0
    %237 = vmatprep.subr.mxu0 0.0
    %238 = vmatpush2.msra.mxu0 0.0
    %239 = vmatprep.mubr.f32.mxu0 0.0
    %240 = vmatmul.mubr.f32.gmra.mxu0 %v173
    %v241 = vpop.f32.mrf.mxu0
    %v242 = vadd.f32 0.0, %v241
    %v243 = vpop.f32.mrf.mxu0
    %244 = vdwg.mxu0
    %v246 = vrot.slane %v242, 7
    %v248 = vadd.f32 %v142, %v246
    %v249 = vtanh.pop %v248
    %v250 = vmul.f32 %v249, %v56
    %v251 = vadd.f32 %v250, %v57
    %v253 = vrot.slane %v162, 7
    %v255 = vmul.f32 %v251, %v253
    %257 = vrot.lane.b32.xlu0 %v251, 64
    %v258 = vpop.permute.xlu0 %257
    %v260 = vmul.f32 %v251, %v258
    %262 = vrot.lane.b32.xlu0 %v260, 32
    %v263 = vpop.permute.xlu0 %262
    %v265 = vadd.f32 %v255, %v263
    %v266 = vtanh.pop %v265
    %268 = vrot.lane.b32.xlu0 %v266, 64
    %v269 = vpop.permute.xlu0 %268
    %v271 = vmul.f32 %v251, %v269
    %v273 = vrot.slane %v271, 1
    %274 = vrot.lane.b32.xlu0 %v273, 32
    %v275 = vpop.permute.xlu0 %274
    %v276 = vsel %vm172, %v275, 0
    %278 = vmatprep.subr.mxu0 0.0
    %279 = vmatpush1.msra.mxu0 0.0
    %280 = vmatprep.subr.mxu0 0.0
    %281 = vmatpush1.msra.mxu0 0.0
    %282 = vmatprep.subr.mxu0 0.0
    %283 = vmatpush1.msra.mxu0 0.0
    %284 = vmatprep.subr.mxu0 0.0
    %285 = vmatpush1.msra.mxu0 0.0
    %286 = vmatprep.subr.mxu0 0.0
    %287 = vmatpush1.msra.mxu0 0.0
    %288 = vmatprep.subr.mxu0 0.0
    %289 = vmatpush1.msra.mxu0 0.0
    %290 = vmatprep.subr.mxu0 0.0
    %291 = vmatpush1.msra.mxu0 0.0
    %292 = vmatprep.subr.mxu0 0.0
    %293 = vmatpush1.msra.mxu0 0.0
    %294 = vmatprep.subr.mxu0 0.0
    %295 = vmatpush1.msra.mxu0 0.0
    %296 = vmatprep.subr.mxu0 0.0
    %297 = vmatpush1.msra.mxu0 0.0
    %298 = vmatprep.subr.mxu0 0.0
    %299 = vmatpush1.msra.mxu0 0.0
    %300 = vmatprep.subr.mxu0 0.0
    %301 = vmatpush1.msra.mxu0 0.0
    %302 = vmatprep.subr.mxu0 0.0
    %303 = vmatpush1.msra.mxu0 %v148
    %304 = vmatprep.subr.mxu0 0.0
    %305 = vmatpush1.msra.mxu0 %v147
    %306 = vmatprep.subr.mxu0 0.0
    %307 = vmatpush1.msra.mxu0 %v146
    %308 = vmatprep.subr.mxu0 0.0
    %309 = vmatpush1.msra.mxu0 %v145
    %310 = vmatprep.subr.mxu0 0.0
    %311 = vmatpush2.msra.mxu0 0.0
    %312 = vmatprep.subr.mxu0 0.0
    %313 = vmatpush2.msra.mxu0 0.0
    %314 = vmatprep.subr.mxu0 0.0
    %315 = vmatpush2.msra.mxu0 0.0
    %316 = vmatprep.subr.mxu0 0.0
    %317 = vmatpush2.msra.mxu0 0.0
    %318 = vmatprep.subr.mxu0 0.0
    %319 = vmatpush2.msra.mxu0 0.0
    %320 = vmatprep.subr.mxu0 0.0
    %321 = vmatpush2.msra.mxu0 0.0
    %322 = vmatprep.subr.mxu0 0.0
    %323 = vmatpush2.msra.mxu0 0.0
    %324 = vmatprep.subr.mxu0 0.0
    %325 = vmatpush2.msra.mxu0 0.0
    %326 = vmatprep.subr.mxu0 0.0
    %327 = vmatpush2.msra.mxu0 0.0
    %328 = vmatprep.subr.mxu0 0.0
    %329 = vmatpush2.msra.mxu0 0.0
    %330 = vmatprep.subr.mxu0 0.0
    %331 = vmatpush2.msra.mxu0 0.0
    %332 = vmatprep.subr.mxu0 0.0
    %333 = vmatpush2.msra.mxu0 0.0
    %334 = vmatprep.subr.mxu0 0.0
    %335 = vmatpush2.msra.mxu0 0.0
    %336 = vmatprep.subr.mxu0 0.0
    %337 = vmatpush2.msra.mxu0 0.0
    %338 = vmatprep.subr.mxu0 0.0
    %339 = vmatpush2.msra.mxu0 0.0
    %340 = vmatprep.subr.mxu0 0.0
    %341 = vmatpush2.msra.mxu0 0.0
    %342 = vmatprep.mubr.f32.mxu0 0.0
    %343 = vmatmul.mubr.f32.gmra.mxu0 %v276
    %v344 = vpop.f32.mrf.mxu0
    %v345 = vadd.f32 0.0, %v344
    %v346 = vpop.f32.mrf.mxu0
    %347 = vdwg.mxu0
    %v349 = vrot.slane %v345, 6
    %v351 = vadd.f32 %v142, %v349
    %v352 = vtanh.pop %v351
    %v353 = vmul.f32 %v352, %v56
    %v354 = vadd.f32 %v353, %v57
    %v356 = vrot.slane %v265, 7
    %v358 = vmul.f32 %v354, %v356
    %360 = vrot.lane.b32.xlu0 %v354, 64
    %v361 = vpop.permute.xlu0 %360
    %v363 = vmul.f32 %v354, %v361
    %365 = vrot.lane.b32.xlu0 %v363, 32
    %v366 = vpop.permute.xlu0 %365
    %v368 = vadd.f32 %v358, %v366
    %v369 = vtanh.pop %v368
    %371 = vrot.lane.b32.xlu0 %v369, 64
    %v372 = vpop.permute.xlu0 %371
    %v374 = vmul.f32 %v354, %v372
    %v376 = vrot.slane %v374, 2
    %377 = vrot.lane.b32.xlu0 %v376, 32
    %v378 = vpop.permute.xlu0 %377
    %v379 = vsel %vm172, %v378, 0
    %381 = vmatprep.subr.mxu0 0.0
    %382 = vmatpush1.msra.mxu0 0.0
    %383 = vmatprep.subr.mxu0 0.0
    %384 = vmatpush1.msra.mxu0 0.0
    %385 = vmatprep.subr.mxu0 0.0
    %386 = vmatpush1.msra.mxu0 0.0
    %387 = vmatprep.subr.mxu0 0.0
    %388 = vmatpush1.msra.mxu0 0.0
    %389 = vmatprep.subr.mxu0 0.0
    %390 = vmatpush1.msra.mxu0 0.0
    %391 = vmatprep.subr.mxu0 0.0
    %392 = vmatpush1.msra.mxu0 0.0
    %393 = vmatprep.subr.mxu0 0.0
    %394 = vmatpush1.msra.mxu0 0.0
    %395 = vmatprep.subr.mxu0 0.0
    %396 = vmatpush1.msra.mxu0 0.0
    %397 = vmatprep.subr.mxu0 0.0
    %398 = vmatpush1.msra.mxu0 0.0
    %399 = vmatprep.subr.mxu0 0.0
    %400 = vmatpush1.msra.mxu0 0.0
    %401 = vmatprep.subr.mxu0 0.0
    %402 = vmatpush1.msra.mxu0 0.0
    %403 = vmatprep.subr.mxu0 0.0
    %404 = vmatpush1.msra.mxu0 0.0
    %405 = vmatprep.subr.mxu0 0.0
    %406 = vmatpush1.msra.mxu0 %v148
    %407 = vmatprep.subr.mxu0 0.0
    %408 = vmatpush1.msra.mxu0 %v147
    %409 = vmatprep.subr.mxu0 0.0
    %410 = vmatpush1.msra.mxu0 %v146
    %411 = vmatprep.subr.mxu0 0.0
    %412 = vmatpush1.msra.mxu0 %v145
    %413 = vmatprep.subr.mxu0 0.0
    %414 = vmatpush2.msra.mxu0 0.0
    %415 = vmatprep.subr.mxu0 0.0
    %416 = vmatpush2.msra.mxu0 0.0
    %417 = vmatprep.subr.mxu0 0.0
    %418 = vmatpush2.msra.mxu0 0.0
    %419 = vmatprep.subr.mxu0 0.0
    %420 = vmatpush2.msra.mxu0 0.0
    %421 = vmatprep.subr.mxu0 0.0
    %422 = vmatpush2.msra.mxu0 0.0
    %423 = vmatprep.subr.mxu0 0.0
    %424 = vmatpush2.msra.mxu0 0.0
    %425 = vmatprep.subr.mxu0 0.0
    %426 = vmatpush2.msra.mxu0 0.0
    %427 = vmatprep.subr.mxu0 0.0
    %428 = vmatpush2.msra.mxu0 0.0
    %429 = vmatprep.subr.mxu0 0.0
    %430 = vmatpush2.msra.mxu0 0.0
    %431 = vmatprep.subr.mxu0 0.0
    %432 = vmatpush2.msra.mxu0 0.0
    %433 = vmatprep.subr.mxu0 0.0
    %434 = vmatpush2.msra.mxu0 0.0
    %435 = vmatprep.subr.mxu0 0.0
    %436 = vmatpush2.msra.mxu0 0.0
    %437 = vmatprep.subr.mxu0 0.0
    %438 = vmatpush2.msra.mxu0 0.0
    %439 = vmatprep.subr.mxu0 0.0
    %440 = vmatpush2.msra.mxu0 0.0
    %441 = vmatprep.subr.mxu0 0.0
    %442 = vmatpush2.msra.mxu0 0.0
    %443 = vmatprep.subr.mxu0 0.0
    %444 = vmatpush2.msra.mxu0 0.0
    %445 = vmatprep.mubr.f32.mxu0 0.0
    %446 = vmatmul.mubr.f32.gmra.mxu0 %v379
    %v447 = vpop.f32.mrf.mxu0
    %v448 = vadd.f32 0.0, %v447
    %v449 = vpop.f32.mrf.mxu0
    %450 = vdwg.mxu0
    %v452 = vrot.slane %v448, 5
    %v454 = vadd.f32 %v142, %v452
    %v455 = vtanh.pop %v454
    %v456 = vmul.f32 %v455, %v56
    %v457 = vadd.f32 %v456, %v57
    %v459 = vrot.slane %v368, 7
    %v461 = vmul.f32 %v457, %v459
    %463 = vrot.lane.b32.xlu0 %v457, 64
    %v464 = vpop.permute.xlu0 %463
    %v466 = vmul.f32 %v457, %v464
    %468 = vrot.lane.b32.xlu0 %v466, 32
    %v469 = vpop.permute.xlu0 %468
    %v471 = vadd.f32 %v461, %v469
    %v472 = vtanh.pop %v471
    %474 = vrot.lane.b32.xlu0 %v472, 64
    %v475 = vpop.permute.xlu0 %474
    %v477 = vmul.f32 %v457, %v475
    %v479 = vrot.slane %v477, 3
    %480 = vrot.lane.b32.xlu0 %v479, 32
    %v481 = vpop.permute.xlu0 %480
    %v482 = vsel %vm172, %v481, 0
    %484 = vmatprep.subr.mxu0 0.0
    %485 = vmatpush1.msra.mxu0 0.0
    %486 = vmatprep.subr.mxu0 0.0
    %487 = vmatpush1.msra.mxu0 0.0
    %488 = vmatprep.subr.mxu0 0.0
    %489 = vmatpush1.msra.mxu0 0.0
    %490 = vmatprep.subr.mxu0 0.0
    %491 = vmatpush1.msra.mxu0 0.0
    %492 = vmatprep.subr.mxu0 0.0
    %493 = vmatpush1.msra.mxu0 0.0
    %494 = vmatprep.subr.mxu0 0.0
    %495 = vmatpush1.msra.mxu0 0.0
    %496 = vmatprep.subr.mxu0 0.0
    %497 = vmatpush1.msra.mxu0 0.0
    %498 = vmatprep.subr.mxu0 0.0
    %499 = vmatpush1.msra.mxu0 0.0
    %500 = vmatprep.subr.mxu0 0.0
    %501 = vmatpush1.msra.mxu0 0.0
    %502 = vmatprep.subr.mxu0 0.0
    %503 = vmatpush1.msra.mxu0 0.0
    %504 = vmatprep.subr.mxu0 0.0
    %505 = vmatpush1.msra.mxu0 0.0
    %506 = vmatprep.subr.mxu0 0.0
    %507 = vmatpush1.msra.mxu0 0.0
    %508 = vmatprep.subr.mxu0 0.0
    %509 = vmatpush1.msra.mxu0 %v148
    %510 = vmatprep.subr.mxu0 0.0
    %511 = vmatpush1.msra.mxu0 %v147
    %512 = vmatprep.subr.mxu0 0.0
    %513 = vmatpush1.msra.mxu0 %v146
    %514 = vmatprep.subr.mxu0 0.0
    %515 = vmatpush1.msra.mxu0 %v145
    %516 = vmatprep.subr.mxu0 0.0
    %517 = vmatpush2.msra.mxu0 0.0
    %518 = vmatprep.subr.mxu0 0.0
    %519 = vmatpush2.msra.mxu0 0.0
    %520 = vmatprep.subr.mxu0 0.0
    %521 = vmatpush2.msra.mxu0 0.0
    %522 = vmatprep.subr.mxu0 0.0
    %523 = vmatpush2.msra.mxu0 0.0
    %524 = vmatprep.subr.mxu0 0.0
    %525 = vmatpush2.msra.mxu0 0.0
    %526 = vmatprep.subr.mxu0 0.0
    %527 = vmatpush2.msra.mxu0 0.0
    %528 = vmatprep.subr.mxu0 0.0
    %529 = vmatpush2.msra.mxu0 0.0
    %530 = vmatprep.subr.mxu0 0.0
    %531 = vmatpush2.msra.mxu0 0.0
    %532 = vmatprep.subr.mxu0 0.0
    %533 = vmatpush2.msra.mxu0 0.0
    %534 = vmatprep.subr.mxu0 0.0
    %535 = vmatpush2.msra.mxu0 0.0
    %536 = vmatprep.subr.mxu0 0.0
    %537 = vmatpush2.msra.mxu0 0.0
    %538 = vmatprep.subr.mxu0 0.0
    %539 = vmatpush2.msra.mxu0 0.0
    %540 = vmatprep.subr.mxu0 0.0
    %541 = vmatpush2.msra.mxu0 0.0
    %542 = vmatprep.subr.mxu0 0.0
    %543 = vmatpush2.msra.mxu0 0.0
    %544 = vmatprep.subr.mxu0 0.0
    %545 = vmatpush2.msra.mxu0 0.0
    %546 = vmatprep.subr.mxu0 0.0
    %547 = vmatpush2.msra.mxu0 0.0
    %548 = vmatprep.mubr.f32.mxu0 0.0
    %549 = vmatmul.mubr.f32.gmra.mxu0 %v482
    %v550 = vpop.f32.mrf.mxu0
    %v551 = vadd.f32 0.0, %v550
    %v552 = vpop.f32.mrf.mxu0
    %553 = vdwg.mxu0
    %v555 = vrot.slane %v551, 4
    %v557 = vadd.f32 %v142, %v555
    %v558 = vtanh.pop %v557
    %v559 = vmul.f32 %v558, %v56
    %v560 = vadd.f32 %v559, %v57
    %v562 = vrot.slane %v471, 7
    %v564 = vmul.f32 %v560, %v562
    %566 = vrot.lane.b32.xlu0 %v560, 64
    %v567 = vpop.permute.xlu0 %566
    %v569 = vmul.f32 %v560, %v567
    %571 = vrot.lane.b32.xlu0 %v569, 32
    %v572 = vpop.permute.xlu0 %571
    %v574 = vadd.f32 %v564, %v572
    %v575 = vtanh.pop %v574
    %577 = vrot.lane.b32.xlu0 %v575, 64
    %v578 = vpop.permute.xlu0 %577
    %v580 = vmul.f32 %v560, %v578
    %v582 = vrot.slane %v580, 4
    %583 = vrot.lane.b32.xlu0 %v582, 32
    %v584 = vpop.permute.xlu0 %583
    %v585 = vsel %vm172, %v584, 0
    %587 = vmatprep.subr.mxu0 0.0
    %588 = vmatpush1.msra.mxu0 0.0
    %589 = vmatprep.subr.mxu0 0.0
    %590 = vmatpush1.msra.mxu0 0.0
    %591 = vmatprep.subr.mxu0 0.0
    %592 = vmatpush1.msra.mxu0 0.0
    %593 = vmatprep.subr.mxu0 0.0
    %594 = vmatpush1.msra.mxu0 0.0
    %595 = vmatprep.subr.mxu0 0.0
    %596 = vmatpush1.msra.mxu0 0.0
    %597 = vmatprep.subr.mxu0 0.0
    %598 = vmatpush1.msra.mxu0 0.0
    %599 = vmatprep.subr.mxu0 0.0
    %600 = vmatpush1.msra.mxu0 0.0
    %601 = vmatprep.subr.mxu0 0.0
    %602 = vmatpush1.msra.mxu0 0.0
    %603 = vmatprep.subr.mxu0 0.0
    %604 = vmatpush1.msra.mxu0 0.0
    %605 = vmatprep.subr.mxu0 0.0
    %606 = vmatpush1.msra.mxu0 0.0
    %607 = vmatprep.subr.mxu0 0.0
    %608 = vmatpush1.msra.mxu0 0.0
    %609 = vmatprep.subr.mxu0 0.0
    %610 = vmatpush1.msra.mxu0 0.0
    %611 = vmatprep.subr.mxu0 0.0
    %612 = vmatpush1.msra.mxu0 %v148
    %613 = vmatprep.subr.mxu0 0.0
    %614 = vmatpush1.msra.mxu0 %v147
    %615 = vmatprep.subr.mxu0 0.0
    %616 = vmatpush1.msra.mxu0 %v146
    %617 = vmatprep.subr.mxu0 0.0
    %618 = vmatpush1.msra.mxu0 %v145
    %619 = vmatprep.subr.mxu0 0.0
    %620 = vmatpush2.msra.mxu0 0.0
    %621 = vmatprep.subr.mxu0 0.0
    %622 = vmatpush2.msra.mxu0 0.0
    %623 = vmatprep.subr.mxu0 0.0
    %624 = vmatpush2.msra.mxu0 0.0
    %625 = vmatprep.subr.mxu0 0.0
    %626 = vmatpush2.msra.mxu0 0.0
    %627 = vmatprep.subr.mxu0 0.0
    %628 = vmatpush2.msra.mxu0 0.0
    %629 = vmatprep.subr.mxu0 0.0
    %630 = vmatpush2.msra.mxu0 0.0
    %631 = vmatprep.subr.mxu0 0.0
    %632 = vmatpush2.msra.mxu0 0.0
    %633 = vmatprep.subr.mxu0 0.0
    %634 = vmatpush2.msra.mxu0 0.0
    %635 = vmatprep.subr.mxu0 0.0
    %636 = vmatpush2.msra.mxu0 0.0
    %637 = vmatprep.subr.mxu0 0.0
    %638 = vmatpush2.msra.mxu0 0.0
    %639 = vmatprep.subr.mxu0 0.0
    %640 = vmatpush2.msra.mxu0 0.0
    %641 = vmatprep.subr.mxu0 0.0
    %642 = vmatpush2.msra.mxu0 0.0
    %643 = vmatprep.subr.mxu0 0.0
    %644 = vmatpush2.msra.mxu0 0.0
    %645 = vmatprep.subr.mxu0 0.0
    %646 = vmatpush2.msra.mxu0 0.0
    %647 = vmatprep.subr.mxu0 0.0
    %648 = vmatpush2.msra.mxu0 0.0
    %649 = vmatprep.subr.mxu0 0.0
    %650 = vmatpush2.msra.mxu0 0.0
    %651 = vmatprep.mubr.f32.mxu0 0.0
    %652 = vmatmul.mubr.f32.gmra.mxu0 %v585
    %v653 = vpop.f32.mrf.mxu0
    %v654 = vadd.f32 0.0, %v653
    %v655 = vpop.f32.mrf.mxu0
    %656 = vdwg.mxu0
    %v658 = vrot.slane %v654, 3
    %v660 = vadd.f32 %v142, %v658
    %v661 = vtanh.pop %v660
    %v662 = vmul.f32 %v661, %v56
    %v663 = vadd.f32 %v662, %v57
    %v665 = vrot.slane %v574, 7
    %v667 = vmul.f32 %v663, %v665
    %669 = vrot.lane.b32.xlu0 %v663, 64
    %v670 = vpop.permute.xlu0 %669
    %v672 = vmul.f32 %v663, %v670
    %674 = vrot.lane.b32.xlu0 %v672, 32
    %v675 = vpop.permute.xlu0 %674
    %v677 = vadd.f32 %v667, %v675
    %v678 = vtanh.pop %v677
    %680 = vrot.lane.b32.xlu0 %v678, 64
    %v681 = vpop.permute.xlu0 %680
    %v683 = vmul.f32 %v663, %v681
    %v685 = vrot.slane %v683, 5
    %686 = vrot.lane.b32.xlu0 %v685, 32
    %v687 = vpop.permute.xlu0 %686
    %v688 = vsel %vm172, %v687, 0
    %690 = vmatprep.subr.mxu0 0.0
    %691 = vmatpush1.msra.mxu0 0.0
    %692 = vmatprep.subr.mxu0 0.0
    %693 = vmatpush1.msra.mxu0 0.0
    %694 = vmatprep.subr.mxu0 0.0
    %695 = vmatpush1.msra.mxu0 0.0
    %696 = vmatprep.subr.mxu0 0.0
    %697 = vmatpush1.msra.mxu0 0.0
    %698 = vmatprep.subr.mxu0 0.0
    %699 = vmatpush1.msra.mxu0 0.0
    %700 = vmatprep.subr.mxu0 0.0
    %701 = vmatpush1.msra.mxu0 0.0
    %702 = vmatprep.subr.mxu0 0.0
    %703 = vmatpush1.msra.mxu0 0.0
    %704 = vmatprep.subr.mxu0 0.0
    %705 = vmatpush1.msra.mxu0 0.0
    %706 = vmatprep.subr.mxu0 0.0
    %707 = vmatpush1.msra.mxu0 0.0
    %708 = vmatprep.subr.mxu0 0.0
    %709 = vmatpush1.msra.mxu0 0.0
    %710 = vmatprep.subr.mxu0 0.0
    %711 = vmatpush1.msra.mxu0 0.0
    %712 = vmatprep.subr.mxu0 0.0
    %713 = vmatpush1.msra.mxu0 0.0
    %714 = vmatprep.subr.mxu0 0.0
    %715 = vmatpush1.msra.mxu0 %v148
    %716 = vmatprep.subr.mxu0 0.0
    %717 = vmatpush1.msra.mxu0 %v147
    %718 = vmatprep.subr.mxu0 0.0
    %719 = vmatpush1.msra.mxu0 %v146
    %720 = vmatprep.subr.mxu0 0.0
    %721 = vmatpush1.msra.mxu0 %v145
    %722 = vmatprep.subr.mxu0 0.0
    %723 = vmatpush2.msra.mxu0 0.0
    %724 = vmatprep.subr.mxu0 0.0
    %725 = vmatpush2.msra.mxu0 0.0
    %726 = vmatprep.subr.mxu0 0.0
    %727 = vmatpush2.msra.mxu0 0.0
    %728 = vmatprep.subr.mxu0 0.0
    %729 = vmatpush2.msra.mxu0 0.0
    %730 = vmatprep.subr.mxu0 0.0
    %731 = vmatpush2.msra.mxu0 0.0
    %732 = vmatprep.subr.mxu0 0.0
    %733 = vmatpush2.msra.mxu0 0.0
    %734 = vmatprep.subr.mxu0 0.0
    %735 = vmatpush2.msra.mxu0 0.0
    %736 = vmatprep.subr.mxu0 0.0
    %737 = vmatpush2.msra.mxu0 0.0
    %738 = vmatprep.subr.mxu0 0.0
    %739 = vmatpush2.msra.mxu0 0.0
    %740 = vmatprep.subr.mxu0 0.0
    %741 = vmatpush2.msra.mxu0 0.0
    %742 = vmatprep.subr.mxu0 0.0
    %743 = vmatpush2.msra.mxu0 0.0
    %744 = vmatprep.subr.mxu0 0.0
    %745 = vmatpush2.msra.mxu0 0.0
    %746 = vmatprep.subr.mxu0 0.0
    %747 = vmatpush2.msra.mxu0 0.0
    %748 = vmatprep.subr.mxu0 0.0
    %749 = vmatpush2.msra.mxu0 0.0
    %750 = vmatprep.subr.mxu0 0.0
    %751 = vmatpush2.msra.mxu0 0.0
    %752 = vmatprep.subr.mxu0 0.0
    %753 = vmatpush2.msra.mxu0 0.0
    %754 = vmatprep.mubr.f32.mxu0 0.0
    %755 = vmatmul.mubr.f32.gmra.mxu0 %v688
    %v756 = vpop.f32.mrf.mxu0
    %v757 = vadd.f32 0.0, %v756
    %v758 = vpop.f32.mrf.mxu0
    %759 = vdwg.mxu0
    %v761 = vrot.slane %v757, 2
    %v763 = vadd.f32 %v142, %v761
    %v764 = vtanh.pop %v763
    %v765 = vmul.f32 %v764, %v56
    %v766 = vadd.f32 %v765, %v57
    %v768 = vrot.slane %v677, 7
    %v770 = vmul.f32 %v766, %v768
    %772 = vrot.lane.b32.xlu0 %v766, 64
    %v773 = vpop.permute.xlu0 %772
    %v775 = vmul.f32 %v766, %v773
    %777 = vrot.lane.b32.xlu0 %v775, 32
    %v778 = vpop.permute.xlu0 %777
    %v780 = vadd.f32 %v770, %v778
    %v781 = vtanh.pop %v780
    %783 = vrot.lane.b32.xlu0 %v781, 64
    %v784 = vpop.permute.xlu0 %783
    %v786 = vmul.f32 %v766, %v784
    %v788 = vrot.slane %v786, 6
    %789 = vrot.lane.b32.xlu0 %v788, 32
    %v790 = vpop.permute.xlu0 %789
    %v791 = vsel %vm172, %v790, 0
    %793 = vmatprep.subr.mxu0 0.0
    %794 = vmatpush1.msra.mxu0 0.0
    %795 = vmatprep.subr.mxu0 0.0
    %796 = vmatpush1.msra.mxu0 0.0
    %797 = vmatprep.subr.mxu0 0.0
    %798 = vmatpush1.msra.mxu0 0.0
    %799 = vmatprep.subr.mxu0 0.0
    %800 = vmatpush1.msra.mxu0 0.0
    %801 = vmatprep.subr.mxu0 0.0
    %802 = vmatpush1.msra.mxu0 0.0
    %803 = vmatprep.subr.mxu0 0.0
    %804 = vmatpush1.msra.mxu0 0.0
    %805 = vmatprep.subr.mxu0 0.0
    %806 = vmatpush1.msra.mxu0 0.0
    %807 = vmatprep.subr.mxu0 0.0
    %808 = vmatpush1.msra.mxu0 0.0
    %809 = vmatprep.subr.mxu0 0.0
    %810 = vmatpush1.msra.mxu0 0.0
    %811 = vmatprep.subr.mxu0 0.0
    %812 = vmatpush1.msra.mxu0 0.0
    %813 = vmatprep.subr.mxu0 0.0
    %814 = vmatpush1.msra.mxu0 0.0
    %815 = vmatprep.subr.mxu0 0.0
    %816 = vmatpush1.msra.mxu0 0.0
    %817 = vmatprep.subr.mxu0 0.0
    %818 = vmatpush1.msra.mxu0 %v148
    %819 = vmatprep.subr.mxu0 0.0
    %820 = vmatpush1.msra.mxu0 %v147
    %821 = vmatprep.subr.mxu0 0.0
    %822 = vmatpush1.msra.mxu0 %v146
    %823 = vmatprep.subr.mxu0 0.0
    %824 = vmatpush1.msra.mxu0 %v145
    %825 = vmatprep.subr.mxu0 0.0
    %826 = vmatpush2.msra.mxu0 0.0
    %827 = vmatprep.subr.mxu0 0.0
    %828 = vmatpush2.msra.mxu0 0.0
    %829 = vmatprep.subr.mxu0 0.0
    %830 = vmatpush2.msra.mxu0 0.0
    %831 = vmatprep.subr.mxu0 0.0
    %832 = vmatpush2.msra.mxu0 0.0
    %833 = vmatprep.subr.mxu0 0.0
    %834 = vmatpush2.msra.mxu0 0.0
    %835 = vmatprep.subr.mxu0 0.0
    %836 = vmatpush2.msra.mxu0 0.0
    %837 = vmatprep.subr.mxu0 0.0
    %838 = vmatpush2.msra.mxu0 0.0
    %839 = vmatprep.subr.mxu0 0.0
    %840 = vmatpush2.msra.mxu0 0.0
    %841 = vmatprep.subr.mxu0 0.0
    %842 = vmatpush2.msra.mxu0 0.0
    %843 = vmatprep.subr.mxu0 0.0
    %844 = vmatpush2.msra.mxu0 0.0
    %845 = vmatprep.subr.mxu0 0.0
    %846 = vmatpush2.msra.mxu0 0.0
    %847 = vmatprep.subr.mxu0 0.0
    %848 = vmatpush2.msra.mxu0 0.0
    %849 = vmatprep.subr.mxu0 0.0
    %850 = vmatpush2.msra.mxu0 0.0
    %851 = vmatprep.subr.mxu0 0.0
    %852 = vmatpush2.msra.mxu0 0.0
    %853 = vmatprep.subr.mxu0 0.0
    %854 = vmatpush2.msra.mxu0 0.0
    %855 = vmatprep.subr.mxu0 0.0
    %856 = vmatpush2.msra.mxu0 0.0
    %857 = vmatprep.mubr.f32.mxu0 0.0
    %858 = vmatmul.mubr.f32.gmra.mxu0 %v791
    %v859 = vpop.f32.mrf.mxu0
    %v860 = vadd.f32 0.0, %v859
    %v861 = vpop.f32.mrf.mxu0
    %862 = vdwg.mxu0
    %v864 = vrot.slane %v860, 1
    %v866 = vadd.f32 %v142, %v864
    %v867 = vtanh.pop %v866
    %v868 = vmul.f32 %v867, %v56
    %v869 = vadd.f32 %v868, %v57
    %v871 = vrot.slane %v780, 7
    %v873 = vmul.f32 %v869, %v871
    %875 = vrot.lane.b32.xlu0 %v869, 64
    %v876 = vpop.permute.xlu0 %875
    %v878 = vmul.f32 %v869, %v876
    %880 = vrot.lane.b32.xlu0 %v878, 32
    %v881 = vpop.permute.xlu0 %880
    %v883 = vadd.f32 %v873, %v881
    %v884 = vtanh.pop %v883
    %886 = vrot.lane.b32.xlu0 %v884, 64
    %v887 = vpop.permute.xlu0 %886
    %v889 = vmul.f32 %v869, %v887
    %vm890 = vcmask 1040384
    %v891 = vsel %vm890, %v168, %v271
    %vm892 = vcmask 1041408
    %v893 = vsel %vm892, %v891, %v374
    %vm894 = vcmask 1042432
    %v895 = vsel %vm894, %v893, %v477
    %v896 = vsel %vm71, %v895, %v580
    %vm897 = vcmask 1044480
    %v898 = vsel %vm897, %v896, %v683
    %vm899 = vcmask 1045504
    %v900 = vsel %vm899, %v898, %v786
    %vm901 = vcmask 1046528
    %v902 = vsel %vm901, %v900, %v889
    %v903 = vld [vmem:[#allocation4] sm:$0xff]
    %v904 = vld [vmem:[#allocation4 + $0x8] sm:$0xff]
    %v905 = vld [vmem:[#allocation4 + $0x10] sm:$0xff]
    %v906 = vld [vmem:[#allocation4 + $0x18] sm:$0xff]
    %v907 = vld [vmem:[%s5] sm:$0x1]
    %v909 = vlaneseq
    %v910 = vshrl.u32 %v909, 7
    %v911 = vsub.s32 0, %v910
    %v912 = vrot.slane %v907, %v911
    %915 = vrot.lane.b32.xlu0 %v902, 32
    %v916 = vpop.permute.xlu0 %915
    %v917 = vsel %vm172, %v916, 0
    %919 = vmatprep.subr.mxu0 0.0
    %920 = vmatpush1.msra.mxu0 0.0
    %921 = vmatprep.subr.mxu0 0.0
    %922 = vmatpush1.msra.mxu0 0.0
    %923 = vmatprep.subr.mxu0 0.0
    %924 = vmatpush1.msra.mxu0 0.0
    %925 = vmatprep.subr.mxu0 0.0
    %926 = vmatpush1.msra.mxu0 0.0
    %927 = vmatprep.subr.mxu0 0.0
    %928 = vmatpush1.msra.mxu0 0.0
    %929 = vmatprep.subr.mxu0 0.0
    %930 = vmatpush1.msra.mxu0 0.0
    %931 = vmatprep.subr.mxu0 0.0
    %932 = vmatpush1.msra.mxu0 0.0
    %933 = vmatprep.subr.mxu0 0.0
    %934 = vmatpush1.msra.mxu0 0.0
    %935 = vmatprep.subr.mxu0 0.0
    %936 = vmatpush1.msra.mxu0 0.0
    %937 = vmatprep.subr.mxu0 0.0
    %938 = vmatpush1.msra.mxu0 0.0
    %939 = vmatprep.subr.mxu0 0.0
    %940 = vmatpush1.msra.mxu0 0.0
    %941 = vmatprep.subr.mxu0 0.0
    %942 = vmatpush1.msra.mxu0 0.0
    %943 = vmatprep.subr.mxu0 0.0
    %944 = vmatpush1.msra.mxu0 %v906
    %945 = vmatprep.subr.mxu0 0.0
    %946 = vmatpush1.msra.mxu0 %v905
    %947 = vmatprep.subr.mxu0 0.0
    %948 = vmatpush1.msra.mxu0 %v904
    %949 = vmatprep.subr.mxu0 0.0
    %950 = vmatpush1.msra.mxu0 %v903
    %951 = vmatprep.subr.mxu0 0.0
    %952 = vmatpush2.msra.mxu0 0.0
    %953 = vmatprep.subr.mxu0 0.0
    %954 = vmatpush2.msra.mxu0 0.0
    %955 = vmatprep.subr.mxu0 0.0
    %956 = vmatpush2.msra.mxu0 0.0
    %957 = vmatprep.subr.mxu0 0.0
    %958 = vmatpush2.msra.mxu0 0.0
    %959 = vmatprep.subr.mxu0 0.0
    %960 = vmatpush2.msra.mxu0 0.0
    %961 = vmatprep.subr.mxu0 0.0
    %962 = vmatpush2.msra.mxu0 0.0
    %963 = vmatprep.subr.mxu0 0.0
    %964 = vmatpush2.msra.mxu0 0.0
    %965 = vmatprep.subr.mxu0 0.0
    %966 = vmatpush2.msra.mxu0 0.0
    %967 = vmatprep.subr.mxu0 0.0
    %968 = vmatpush2.msra.mxu0 0.0
    %969 = vmatprep.subr.mxu0 0.0
    %970 = vmatpush2.msra.mxu0 0.0
    %971 = vmatprep.subr.mxu0 0.0
    %972 = vmatpush2.msra.mxu0 0.0
    %973 = vmatprep.subr.mxu0 0.0
    %974 = vmatpush2.msra.mxu0 0.0
    %975 = vmatprep.subr.mxu0 0.0
    %976 = vmatpush2.msra.mxu0 0.0
    %977 = vmatprep.subr.mxu0 0.0
    %978 = vmatpush2.msra.mxu0 0.0
    %979 = vmatprep.subr.mxu0 0.0
    %980 = vmatpush2.msra.mxu0 0.0
    %981 = vmatprep.subr.mxu0 0.0
    %982 = vmatpush2.msra.mxu0 0.0
    %983 = vmatprep.mubr.f32.mxu0 0.0
    %984 = vmatmul.mubr.f32.gmra.mxu0 %v917
    %v985 = vpop.f32.mrf.mxu0
    %v986 = vadd.f32 %v912, %v985
    %v987 = vpop.f32.mrf.mxu0
    %988 = vdwg.mxu0
    %989 = vst [vmem:[%s6] sm:$0xff] %v986
    // Predicated region
    $region34: #{lstm_forward.1} parent=1 // pred_check
      _
    $region35: #{lstm_forward.1} parent=1 // pred_check_branch
      %991 = sbr.rel (0) target = $region37
    $region36: #{lstm_forward.1} parent=1 // pred_region
      _
    $region37: #{lstm_forward.1} parent=1 // pred_fallthru
      _
    // Predicated region
    $region38: #{lstm_forward.1} parent=1 // pred_check
      _
    $region39: #{lstm_forward.1} parent=1 // pred_check_branch
      %993 = sbr.rel (0) target = $region41
    $region40: #{lstm_forward.1} parent=1 // pred_region
      _
    $region41: #{lstm_forward.1} parent=1 // pred_fallthru
      _
    %994 = vsyncpa [#allocation3], 1
    %995 = vsyncpa [#allocation5], 1

</llo_original>
